<compile_context>
chip_gen: v5e
topology: v5e:2x2
jax: 0.10.0
libtpu: 0.0.40
codegen_flags: <defaults>
</compile_context>

<pallas_src>
import jax
import jax.numpy as jnp
from jax.experimental import pallas as pl
from jax.experimental.pallas import tpu as pltpu


def _round_up(x, m):
    return (x + m - 1) // m * m


# ----------------------------------------------------------------------------
# Pallas kernel: one fused affine layer  o = x @ W + b
# ----------------------------------------------------------------------------
def _fused_affine_kernel(x_ref, w_ref, b_ref, o_ref):
    acc = jnp.dot(x_ref[...], w_ref[...], preferred_element_type=jnp.float32)
    o_ref[...] = (acc + b_ref[...]).astype(o_ref.dtype)


# ----------------------------------------------------------------------------
# One-time parameter fusion (plain JAX, runs at setup time, not per call)
# ----------------------------------------------------------------------------
def fuse_hypernet_params(params):
    """Collapse the activation-free 5-layer stack into one affine map.

    (((x@W1+b1)@W2+b2)@W3+b3)@W4+b4)@W5+b5  ==  x @ W_eff + b_eff
    """
    w_eff = params["w1"]          # [32, 256]
    b_eff = params["b1"]          # [1, 256]
    for i in range(2, 6):
        w = params[f"w{i}"]
        b = params[f"b{i}"]
        w_eff = jnp.dot(w_eff, w, preferred_element_type=jnp.float32)
        b_eff = jnp.dot(b_eff, w, preferred_element_type=jnp.float32) + b
    return w_eff, b_eff           # [32, N], [1, N]


# ----------------------------------------------------------------------------
# Per-call forward: single Pallas matmul with lane-dense, tiled output
# ----------------------------------------------------------------------------
def hypernet_forward_fused(x, w_eff, b_eff, *, tile_m=128, tile_n=512):
    """x: [B, 32] f32;  w_eff: [32, N];  b_eff: [1, N]  ->  [B, N] f32."""
    B, K = x.shape
    N = w_eff.shape[1]

    # Sublane-aligned M, lane-dense N (multiple of 128 -> unmasked stores).
    B_pad = max(_round_up(B, 8), 8)
    N_pad = max(_round_up(N, 128), 128)

    tm = min(tile_m, B_pad)
    tn = min(tile_n, N_pad)
    B_pad = _round_up(B_pad, tm)
    N_pad = _round_up(N_pad, tn)

    x_p = jnp.zeros((B_pad, K), jnp.float32).at[:B, :].set(x)
    w_p = jnp.zeros((K, N_pad), jnp.float32).at[:, :N].set(w_eff)
    b_p = jnp.zeros((1, N_pad), jnp.float32).at[:, :N].set(b_eff)

    grid = (B_pad // tm, N_pad // tn)

    cost = pl.CostEstimate(
        flops=2 * B_pad * K * N_pad,
        transcendentals=0,
        bytes_accessed=4 * (B_pad * K + K * N_pad + N_pad + B_pad * N_pad),
    )

    out = pl.pallas_call(
        _fused_affine_kernel,
        out_shape=jax.ShapeDtypeStruct((B_pad, N_pad), jnp.float32),
        grid_spec=pltpu.PrefetchScalarGridSpec(
            num_scalar_prefetch=0,
            grid=grid,
            in_specs=[
                pl.BlockSpec((tm, K), lambda i, j: (i, 0)),   # x tile
                pl.BlockSpec((K, tn), lambda i, j: (0, j)),   # W_eff column tile
                pl.BlockSpec((1, tn), lambda i, j: (0, j)),   # bias column tile
            ],
            out_specs=pl.BlockSpec((tm, tn), lambda i, j: (i, j)),
        ),
        compiler_params=pltpu.CompilerParams(
            # Both axes independent -> shards across v7x's 2 TensorCores.
            dimension_semantics=("parallel", "parallel"),
        ),
        cost_estimate=cost,
    )(x_p, w_p, b_p)

    return out[:B, :N]


def usehypernetwork_forward(x, fused_params, output_size):
    """Full usehypernetwork.forward: hypernet + reshape to [output_size, -1]."""
    w_eff, b_eff = fused_params
    weights = hypernet_forward_fused(x, w_eff, b_eff)
    total = weights.shape[0] * weights.shape[1]
    if total % output_size != 0:
        raise ValueError(
            f"B*num_weights ({total}) not divisible by output_size ({output_size})")
    return jnp.reshape(weights, (output_size, -1))


# ----------------------------------------------------------------------------
# Parameter init (mirrors nn.Linear shapes; stored as [in, out] / [1, out])
# ----------------------------------------------------------------------------
def init_params(key, num_weights):
    sizes = [(32, 256), (256, 256), (256, 256), (256, 256), (256, num_weights)]
    params = {}
    for i, (fan_in, fan_out) in enumerate(sizes, start=1):
        key, kw, kb = jax.random.split(key, 3)
        bound = 1.0 / jnp.sqrt(fan_in)
        params[f"w{i}"] = jax.random.uniform(
            kw, (fan_in, fan_out), jnp.float32, -bound, bound)
        params[f"b{i}"] = jax.random.uniform(
            kb, (1, fan_out), jnp.float32, -bound, bound)
    return params


def _reference(x, params):
    h = x
    for i in range(1, 6):
        h = h @ params[f"w{i}"] + params[f"b{i}"]
    return h


if __name__ == "__main__":
    key = jax.random.PRNGKey(0)

    # Small, consistent shapes: batch B=2, input dim 32 (fixed by Linear(32,256)),
    # num_weights=64, output_size=8 -> reshape [2,64] -> [8,16].
    B = 2
    num_weights = 64
    output_size = 8

    key, kx, kp = jax.random.split(key, 3)
    x = jax.random.normal(kx, (B, 32), jnp.float32)
    params = init_params(kp, num_weights)

    # One-time setup (amortized across calls), then the per-call Pallas kernel.
    fused = fuse_hypernet_params(params)

    out = usehypernetwork_forward(x, fused, output_size)
    out = jax.block_until_ready(out)

    # Sanity check against the un-fused plain-JAX 5-layer reference.
    ref = jnp.reshape(_reference(x, params), (output_size, -1))
    assert out.shape == (output_size, (B * num_weights) // output_size)
    assert jnp.allclose(out, ref, atol=1e-3, rtol=1e-3), float(
        jnp.max(jnp.abs(out - ref)))

    print("KERNEL_OK")
</pallas_src>

<mosaic_0001>
module attributes {stable_mosaic.version = 11 : i64} {
  func.func @_fused_affine_kernel(%arg0: i32, %arg1: i32, %arg2: memref<8x32xf32, #tpu.memory_space<vmem>>, %arg3: memref<32x128xf32, #tpu.memory_space<vmem>>, %arg4: memref<1x128xf32, #tpu.memory_space<vmem>>, %arg5: memref<8x128xf32, #tpu.memory_space<vmem>>) attributes {dimension_semantics = [#tpu.dimension_semantics<parallel>, #tpu.dimension_semantics<parallel>], iteration_bounds = array<i64: 1, 1>, scalar_prefetch = 0 : i64, scratch_operands = 0 : i64, tpu.core_type = #tpu.core_type<tc>, window_params = [{transform_indices = @transform_0, window_bounds = array<i64: 8, 32>}, {transform_indices = @transform_1, window_bounds = array<i64: 32, 128>}, {transform_indices = @transform_2, window_bounds = array<i64: 1, 128>}, {transform_indices = @transform_3, window_bounds = array<i64: 8, 128>}]} {
    %c0 = arith.constant 0 : index
    %c0_0 = arith.constant 0 : index
    %0 = vector.load %arg2[%c0, %c0_0] : memref<8x32xf32, #tpu.memory_space<vmem>>, vector<8x32xf32>
    %c0_1 = arith.constant 0 : index
    %c0_2 = arith.constant 0 : index
    %1 = vector.load %arg3[%c0_1, %c0_2] : memref<32x128xf32, #tpu.memory_space<vmem>>, vector<32x128xf32>
    %cst = arith.constant dense<0.000000e+00> : vector<8x128xf32>
    %2 = tpu.matmul %0, %1, %cst {dimension_numbers = #tpu.dot_dimension_numbers<[1], [0], [0], [1], [0, 0, 1, 1], [], []>} : vector<8x32xf32>, vector<32x128xf32>, vector<8x128xf32> -> vector<8x128xf32>
    %c0_3 = arith.constant 0 : index
    %c0_4 = arith.constant 0 : index
    %3 = vector.load %arg4[%c0_3, %c0_4] : memref<1x128xf32, #tpu.memory_space<vmem>>, vector<1x128xf32>
    %4 = vector.broadcast %3 : vector<1x128xf32> to vector<8x128xf32>
    %5 = arith.addf %2, %4 : vector<8x128xf32>
    %c0_5 = arith.constant 0 : index
    %c0_6 = arith.constant 0 : index
    %6 = vector.load %arg5[%c0_5, %c0_6] : memref<8x128xf32, #tpu.memory_space<vmem>>, vector<8x128xf32>
    tpu.vector_store %arg5[%c0_5, %c0_6], %5 {strides = array<i32>} : memref<8x128xf32, #tpu.memory_space<vmem>>, vector<8x128xf32>,
    return
  }
  func.func @transform_0(%arg0: i32, %arg1: i32) -> (i32, i32) {
    %c0_i32 = arith.constant 0 : i32
    %c0_i32_0 = arith.constant 0 : i32
    return %arg0, %c0_i32 : i32, i32
  }
  func.func @transform_1(%arg0: i32, %arg1: i32) -> (i32, i32) {
    %c0_i32 = arith.constant 0 : i32
    %c0_i32_0 = arith.constant 0 : i32
    return %c0_i32, %arg1 : i32, i32
  }
  func.func @transform_2(%arg0: i32, %arg1: i32) -> (i32, i32) {
    %c0_i32 = arith.constant 0 : i32
    %c0_i32_0 = arith.constant 0 : i32
    return %c0_i32, %arg1 : i32, i32
  }
  func.func @transform_3(%arg0: i32, %arg1: i32) -> (i32, i32) {
    %c0_i32 = arith.constant 0 : i32
    return %arg0, %arg1 : i32, i32
  }
}

</mosaic_0001>

<llo_original>
// kernel: tpu_custom_call.1
$region0: #{tpu_custom_call.1}
  #allocation0 [shape = 'u32[]', space=smem, size = 0x4, offset = 0x4, fixed_abs, tag = 'smem constant byte address 0x4 - core index']
  #allocation1 [shape = 'u32[72,128]{1,0:T(1,128)}', space=vmem, size = 0x9000, scoped, tag = 'internal scratch']
  %s0 = inlined_call_operand.hbm [shape: f32[8,32], index: 0, kind: input, shape index: {}]
  %s1 = inlined_call_operand.hbm [shape: f32[32,128], index: 1, kind: input, shape index: {}]
  %s2 = inlined_call_operand.vmem [shape: f32[1,128], index: 2, kind: input, shape index: {}]
  %s3 = inlined_call_operand.hbm [shape: f32[8,128], index: 3, kind: output, shape index: {}]
  %s4 = sld [smem:[#allocation0]]
  $region30: #{tpu_custom_call.1} parent=0
    _
  %s6 = ssub.s32 1, %s4
  %s7 = scalar_select 0, %s6, %s4
  $region1: #{tpu_custom_call.1} parent=0
    #allocation2 [shape = 'u8[4096]{0}', space=vmem, size = 0x1000, scoped, tag = 'input window, operand 0, single buffered']
    #allocation3 [shape = 's32[1]{0}', space=sflag, size = 0x4, scoped, tag = 'scoped memory for tpu_custom_call.1']
    #allocation4 [shape = 's32[1]{0}', space=sflag, size = 0x4, scoped, tag = 'scoped memory for tpu_custom_call.1']
    #allocation5 [shape = 'u8[16384]{0}', space=vmem, size = 0x4000, scoped, tag = 'input window, operand 1, single buffered']
    #allocation6 [shape = 's32[1]{0}', space=sflag, size = 0x4, scoped, tag = 'scoped memory for tpu_custom_call.1']
    #allocation7 [shape = 'u8[4096]{0}', space=vmem, size = 0x1000, scoped, tag = 'output window, operand 0, single buffered']
    %8 = vsyncpa [#allocation3], 0
    %9 = vsyncpa [#allocation6], 0
    %10 = vsyncpa [#allocation4], 0
    // Predicated region
    $region2: #{tpu_custom_call.1} parent=1 // pred_check
      _
    $region3: #{tpu_custom_call.1} parent=1 // pred_check_branch
      %12 = sbr.rel (0) target = $region5
    $region4: #{tpu_custom_call.1} parent=1 // pred_region
      %14 = vsyncadd [#allocation3], 0
      %s16 = sshll.u32 %s0, 4
      %s17 = int_to_ptr.hbm [resolvable:$true] %s16
      %s18 = sshll.u32 [#allocation2], 4
      %s19 = int_to_ptr.vmem [resolvable:$true] %s18
      %21 = dma.hbm_to_vmem [thread:$0]  %s17, 128, %s19, [#allocation3]
    $region5: #{tpu_custom_call.1} parent=1 // pred_fallthru
      _
    // Predicated region
    $region6: #{tpu_custom_call.1} parent=1 // pred_check
      _
    $region7: #{tpu_custom_call.1} parent=1 // pred_check_branch
      %23 = sbr.rel (0) target = $region9
    $region8: #{tpu_custom_call.1} parent=1 // pred_region
      %25 = vsyncadd [#allocation6], 0
      %s26 = sshll.u32 %s1, 4
      %s27 = int_to_ptr.hbm [resolvable:$true] %s26
      %s28 = sshll.u32 [#allocation5], 4
      %s29 = int_to_ptr.vmem [resolvable:$true] %s28
      %34 = dma.hbm_to_vmem [thread:$0]  %s27, 512, %s29, [#allocation6], 128, 128, 8
    $region9: #{tpu_custom_call.1} parent=1 // pred_fallthru
      _
    // Predicated region
    $region10: #{tpu_custom_call.1} parent=1 // pred_check
      _
    $region11: #{tpu_custom_call.1} parent=1 // pred_check_branch
      %36 = sbr.rel (0) target = $region13
    $region12: #{tpu_custom_call.1} parent=1 // pred_region
      _
    $region13: #{tpu_custom_call.1} parent=1 // pred_fallthru
      _
    // Predicated region
    $region14: #{tpu_custom_call.1} parent=1 // pred_check
      _
    $region15: #{tpu_custom_call.1} parent=1 // pred_check_branch
      %38 = sbr.rel (0) target = $region17
    $region16: #{tpu_custom_call.1} parent=1 // pred_region
      %40 = dma.done [#allocation3], 128
    $region17: #{tpu_custom_call.1} parent=1 // pred_fallthru
      _
    // Predicated region
    $region18: #{tpu_custom_call.1} parent=1 // pred_check
      _
    $region19: #{tpu_custom_call.1} parent=1 // pred_check_branch
      %42 = sbr.rel (0) target = $region21
    $region20: #{tpu_custom_call.1} parent=1 // pred_region
      %44 = dma.done [#allocation6], 512
    $region21: #{tpu_custom_call.1} parent=1 // pred_fallthru
      _
    %v45 = vld [vmem:[#allocation2] sm:$0xff]
    %v46 = vld [vmem:[#allocation5] sm:$0xff]
    %v47 = vld [vmem:[#allocation5 + $0x8] sm:$0xff]
    %v48 = vld [vmem:[#allocation5 + $0x10] sm:$0xff]
    %v49 = vld [vmem:[#allocation5 + $0x18] sm:$0xff]
    %v50 = vld [vmem:[%s2] sm:$0x1]
    %v52 = vperm.slane %v50, 0
    %vm54 = vcmask 261120
    %v56 = vsel %vm54, %v45, 0
    %58 = vmatpush.msra.mxu0 0.0
    %59 = vmatpush.msra.mxu0 0.0
    %60 = vmatpush.msra.mxu0 0.0
    %61 = vmatpush.msra.mxu0 0.0
    %62 = vmatpush.msra.mxu0 0.0
    %63 = vmatpush.msra.mxu0 0.0
    %64 = vmatpush.msra.mxu0 0.0
    %65 = vmatpush.msra.mxu0 0.0
    %66 = vmatpush.msra.mxu0 0.0
    %67 = vmatpush.msra.mxu0 0.0
    %68 = vmatpush.msra.mxu0 0.0
    %69 = vmatpush.msra.mxu0 0.0
    %70 = vmatpush.msra.mxu0 %v49
    %71 = vmatpush.msra.mxu0 %v48
    %72 = vmatpush.msra.mxu0 %v47
    %73 = vmatpush.msra.mxu0 %v46
    %74 = vmatmul.f32.gmra.mxu0 %v56
    %v75 = vpop.f32.mrf.mxu0
    %v76 = vadd.f32 %v52, %v75
    %77 = vdwg.mxu0
    %78 = vst [vmem:[#allocation7] sm:$0xff] %v76
    // Predicated region
    $region22: #{tpu_custom_call.1} parent=1 // pred_check
      _
    $region23: #{tpu_custom_call.1} parent=1 // pred_check_branch
      %80 = sbr.rel (0) target = $region25
    $region24: #{tpu_custom_call.1} parent=1 // pred_region
      %82 = vsyncadd [#allocation4], 0
      %s84 = sshll.u32 [#allocation7], 4
      %s85 = int_to_ptr.vmem [resolvable:$true] %s84
      %s86 = sshll.u32 %s3, 4
      %s87 = int_to_ptr.hbm [resolvable:$true] %s86
      %89 = dma.vmem_to_hbm [thread:$0]  %s85, 128, %s87, [#allocation4]
    $region25: #{tpu_custom_call.1} parent=1 // pred_fallthru
      _
    // Predicated region
    $region26: #{tpu_custom_call.1} parent=1 // pred_check
      _
    $region27: #{tpu_custom_call.1} parent=1 // pred_check_branch
      %91 = sbr.rel (0) target = $region29
    $region28: #{tpu_custom_call.1} parent=1 // pred_region
      %93 = dma.done [#allocation4], 128
    $region29: #{tpu_custom_call.1} parent=1 // pred_fallthru
      _
    %94 = vsyncpa [#allocation3], 1
    %95 = vsyncpa [#allocation6], 1
    %96 = vsyncpa [#allocation4], 1

</llo_original>
